<compile_context>
chip_gen: v7x
topology: tpu7x:2x2x1
jax: 0.10.0
libtpu: 0.0.40
codegen_flags: <defaults>
</compile_context>

<pallas_src>
import jax
import jax.numpy as jnp
from jax import lax
from jax.experimental import pallas as pl
from jax.experimental.pallas import tpu as pltpu

_LANES = 128
_SUBLANES = 8
_CHUNK_ROWS = 512                 # inner accumulation chunk: (512,128) f32 = 256 KiB
_TARGET_BLOCK_BYTES = 8 << 20     # ~8 MiB per input per pipeline buffer
_MIN_SPLIT_BYTES = 2 << 20        # split a single-block tensor in two only if halves >= 2 MiB
_XLA_FALLBACK_ELEMS = 1 << 21     # below ~2M elements, plain XLA wins


def _round_up(x: int, m: int) -> int:
    return ((x + m - 1) // m) * m


def _choose_block_rows(rows: int, itemsize: int, target_block_bytes: int) -> int:
    """Pick a block row count (multiple of 8, usually of 512) from a byte budget."""
    budget_rows = max(
        _CHUNK_ROWS,
        (target_block_bytes // (itemsize * _LANES)) // _CHUNK_ROWS * _CHUNK_ROWS,
    )
    if rows > budget_rows:
        return budget_rows
    # Fits in one budget block: keep >= 2 blocks when large enough so a v7x
    # chip can drive both TensorCores ("parallel" grid axis).
    split_rows = 2 * max(_CHUNK_ROWS, _MIN_SPLIT_BYTES // (itemsize * _LANES))
    if rows >= split_rows:
        return _round_up(pl.cdiv(rows, 2), _CHUNK_ROWS)
    if rows >= _CHUNK_ROWS:
        return _round_up(rows, _CHUNK_ROWS)
    return _round_up(rows, _SUBLANES)


def _make_abs_diff_kernel(block_rows: int, chunk_rows: int, num_blocks: int,
                          last_valid_rows: int):
    """Per-block sum of |x - y| reduced to one lane-dense (8, 128) tile."""
    num_chunks = block_rows // chunk_rows
    needs_mask = last_valid_rows < block_rows

    def reduce_block(x_ref, y_ref, row_limit):
        # row_limit: static python int (row-granular mask for the last block) or None.
        if row_limit is not None:
            row0 = lax.broadcasted_iota(jnp.int32, (chunk_rows, _LANES), 0)  # hoisted

        def body(k, acc):
            start = pl.multiple_of(k * chunk_rows, chunk_rows)
            x = x_ref[pl.ds(start, chunk_rows), :].astype(jnp.float32)
            y = y_ref[pl.ds(start, chunk_rows), :].astype(jnp.float32)
            d = jnp.abs(x - y)
            if row_limit is not None:
                # Rows at/after row_limit are out-of-bounds garbage; discard.
                d = jnp.where(row0 + k * chunk_rows < row_limit, d, jnp.float32(0.0))
            # Tile-preserving reshape + leading-dim reduce: pure VALU vreg adds.
            return acc + d.reshape(chunk_rows // _SUBLANES, _SUBLANES, _LANES).sum(axis=0)

        return lax.fori_loop(0, num_chunks, body,
                             jnp.zeros((_SUBLANES, _LANES), jnp.float32))

    def kernel(x_ref, y_ref, o_ref):
        if not needs_mask:
            o_ref[0] = reduce_block(x_ref, y_ref, None)
        else:
            is_last = pl.program_id(0) == num_blocks - 1

            @pl.when(jnp.logical_not(is_last))
            def _():
                o_ref[0] = reduce_block(x_ref, y_ref, None)

            @pl.when(is_last)
            def _():
                o_ref[0] = reduce_block(x_ref, y_ref, last_valid_rows)

    return kernel


def identity_loss(real_image: jax.Array, same_image: jax.Array, scale: float, *,
                  target_block_bytes: int = _TARGET_BLOCK_BYTES,
                  xla_fallback_elems: int = _XLA_FALLBACK_ELEMS) -> jax.Array:
    """JAX/Pallas equivalent of IdentityLoss.forward."""
    assert real_image.shape == same_image.shape
    n_elems = real_image.size
    scale32 = jnp.asarray(scale, jnp.float32)

    # Small-input fast path: fused XLA beats pallas_call fixed cost.
    if n_elems < xla_fallback_elems:
        diff = jnp.abs(real_image.astype(jnp.float32) - same_image.astype(jnp.float32))
        return jnp.mean(diff) * jnp.float32(0.5) * scale32

    x = real_image.reshape(-1)
    y = same_image.reshape(-1)

    # Pad only when the flat size is not lane-divisible (typical image tensors
    # are, so this is usually a free reshape).  Pad to a multiple of 8*128 so
    # the sub-row tail is zero-filled; padded zeros add 0 to the sum.
    if n_elems % _LANES != 0:
        padded = _round_up(n_elems, _SUBLANES * _LANES)
        x = jnp.pad(x, (0, padded - n_elems))
        y = jnp.pad(y, (0, padded - n_elems))
    else:
        padded = n_elems

    rows = padded // _LANES
    itemsize = jnp.dtype(real_image.dtype).itemsize
    block_rows = _choose_block_rows(rows, itemsize, target_block_bytes)
    chunk_rows = min(_CHUNK_ROWS, block_rows)
    num_blocks = pl.cdiv(rows, block_rows)
    last_valid_rows = rows - (num_blocks - 1) * block_rows

    x2 = x.reshape(rows, _LANES)
    y2 = y.reshape(rows, _LANES)

    kernel = _make_abs_diff_kernel(block_rows, chunk_rows, num_blocks, last_valid_rows)

    # Explicit VMEM budget: 2 inputs x 2 pipeline buffers + double-buffered
    # (8,128) f32 output tile + 8 MiB headroom (bounded per-chunk temporaries,
    # internal scratch).  Max ~40 MiB, safe under v7x's 64 MiB physical VMEM.
    block_bytes = block_rows * _LANES * itemsize
    working = 2 * 2 * block_bytes + 2 * _SUBLANES * _LANES * 4
    vmem_limit = int(max(working + (8 << 20), 32 << 20))

    cost = pl.CostEstimate(
        flops=3 * n_elems,
        transcendentals=0,
        bytes_accessed=2 * padded * itemsize + num_blocks * _SUBLANES * _LANES * 4,
    )

    partials = pl.pallas_call(
        kernel,
        out_shape=jax.ShapeDtypeStruct((num_blocks, _SUBLANES, _LANES), jnp.float32),
        grid_spec=pltpu.PrefetchScalarGridSpec(
            num_scalar_prefetch=0,
            grid=(num_blocks,),
            in_specs=[
                pl.BlockSpec((block_rows, _LANES), lambda i: (i, 0)),
                pl.BlockSpec((block_rows, _LANES), lambda i: (i, 0)),
            ],
            out_specs=pl.BlockSpec((1, _SUBLANES, _LANES), lambda i: (i, 0, 0)),
        ),
        compiler_params=pltpu.CompilerParams(
            dimension_semantics=("parallel",),
            vmem_limit_bytes=vmem_limit,
        ),
        cost_estimate=cost,
    )(x2, y2)

    total = jnp.sum(partials)  # tiny (num_blocks, 8, 128) tree reduction in XLA
    loss = total / jnp.float32(n_elems)
    return loss * jnp.float32(0.5) * scale32


if __name__ == "__main__":
    key = jax.random.PRNGKey(0)
    k1, k2, k3, k4, k5, k6, k7, k8 = jax.random.split(key, 8)

    def ref_loss(a, b, s):
        return jnp.mean(jnp.abs(a - b)) * 0.5 * s

    # 1) Small NCHW images (module-typical shape); force the Pallas path.
    real = jax.random.normal(k1, (2, 4, 16, 16), dtype=jnp.float32)
    same = jax.random.normal(k2, (2, 4, 16, 16), dtype=jnp.float32)
    out = identity_loss(real, same, 10.0, xla_fallback_elems=0)
    jax.block_until_ready(out)
    assert jnp.allclose(out, ref_loss(real, same, 10.0), rtol=1e-5, atol=1e-6)

    # 2) Ragged size (not a multiple of 128): exercises the minimal-pad path.
    real_r = jax.random.normal(k3, (3, 5, 7, 11), dtype=jnp.float32)
    same_r = jax.random.normal(k4, (3, 5, 7, 11), dtype=jnp.float32)
    out_r = identity_loss(real_r, same_r, 2.5, xla_fallback_elems=0)
    jax.block_until_ready(out_r)
    assert jnp.allclose(out_r, ref_loss(real_r, same_r, 2.5), rtol=1e-5, atol=1e-6)

    # 3) Multi-block + partial last block (row-granular tail mask) via a small
    #    block byte budget: rows=768, block_rows=512 -> 2 blocks, 256 valid rows
    #    in the last block.
    real_m = jax.random.normal(k5, (2, 3, 128, 128), dtype=jnp.float32)
    same_m = jax.random.normal(k6, (2, 3, 128, 128), dtype=jnp.float32)
    out_m = identity_loss(real_m, same_m, 1.5, target_block_bytes=256 * 1024,
                          xla_fallback_elems=0)
    jax.block_until_ready(out_m)
    assert jnp.allclose(out_m, ref_loss(real_m, same_m, 1.5), rtol=1e-5, atol=1e-6)

    # 4) Single-budget-block tensor that gets split into 2 blocks (v7x 2-TC path).
    real_s = jax.random.normal(k7, (1, 4, 512, 512), dtype=jnp.float32)
    same_s = jax.random.normal(k8, (1, 4, 512, 512), dtype=jnp.float32)
    out_s = identity_loss(real_s, same_s, 0.75, xla_fallback_elems=0)
    jax.block_until_ready(out_s)
    assert jnp.allclose(out_s, ref_loss(real_s, same_s, 0.75), rtol=1e-5, atol=1e-6)

    print("KERNEL_OK")
</pallas_src>

<mosaic_0001>
module attributes {stable_mosaic.version = 11 : i64} {
  func.func @kernel(%arg0: i32, %arg1: memref<16x128xf32, #tpu.memory_space<vmem>>, %arg2: memref<16x128xf32, #tpu.memory_space<vmem>>, %arg3: memref<1x8x128xf32, #tpu.memory_space<vmem>>) attributes {dimension_semantics = [#tpu.dimension_semantics<parallel>], iteration_bounds = array<i64: 1>, scalar_prefetch = 0 : i64, scratch_operands = 0 : i64, tpu.core_type = #tpu.core_type<tc>, window_params = [{transform_indices = @transform_0, window_bounds = array<i64: 16, 128>}, {transform_indices = @transform_1, window_bounds = array<i64: 16, 128>}, {transform_indices = @transform_2, window_bounds = array<i64: 1, 8, 128>}]} {
    %cst = arith.constant 0.000000e+00 : f32
    %0 = vector.broadcast %cst : f32 to vector<8x128xf32>
    %c0_i32 = arith.constant 0 : i32
    %c16_i32 = arith.constant 16 : i32
    %1 = arith.muli %c0_i32, %c16_i32 : i32
    %2 = tpu.assume_multiple %1, 16 : i32
    %3 = arith.index_cast %2 : i32 to index
    %c0 = arith.constant 0 : index
    %4 = vector.load %arg1[%3, %c0] : memref<16x128xf32, #tpu.memory_space<vmem>>, vector<16x128xf32>
    %5 = arith.index_cast %2 : i32 to index
    %c0_0 = arith.constant 0 : index
    %6 = vector.load %arg2[%5, %c0_0] : memref<16x128xf32, #tpu.memory_space<vmem>>, vector<16x128xf32>
    %7 = arith.subf %4, %6 : vector<16x128xf32>
    %8 = math.absf %7 : vector<16x128xf32>
    %9 = vector.shape_cast %8 : vector<16x128xf32> to vector<2x8x128xf32>
    %cst_1 = arith.constant dense<0.000000e+00> : vector<8x128xf32>
    %10 = vector.multi_reduction <add>, %9, %cst_1 [0] : vector<2x8x128xf32> to vector<8x128xf32>
    %11 = arith.addf %0, %10 : vector<8x128xf32>
    %c1_i32 = arith.constant 1 : i32
    %c0_2 = arith.constant 0 : index
    %c0_3 = arith.constant 0 : index
    %c0_4 = arith.constant 0 : index
    %12 = vector.load %arg3[%c0_2, %c0_3, %c0_4] : memref<1x8x128xf32, #tpu.memory_space<vmem>>, vector<1x8x128xf32>
    %13 = vector.shape_cast %12 : vector<1x8x128xf32> to vector<8x128xf32>
    %14 = vector.shape_cast %11 : vector<8x128xf32> to vector<1x8x128xf32>
    tpu.vector_store %arg3[%c0_2, %c0_3, %c0_4], %14 {strides = array<i32>} : memref<1x8x128xf32, #tpu.memory_space<vmem>>, vector<1x8x128xf32>,
    return
  }
  func.func @transform_0(%arg0: i32) -> (i32, i32) {
    %c0_i32 = arith.constant 0 : i32
    %c0_i32_0 = arith.constant 0 : i32
    return %arg0, %c0_i32 : i32, i32
  }
  func.func @transform_1(%arg0: i32) -> (i32, i32) {
    %c0_i32 = arith.constant 0 : i32
    %c0_i32_0 = arith.constant 0 : i32
    return %arg0, %c0_i32 : i32, i32
  }
  func.func @transform_2(%arg0: i32) -> (i32, i32, i32) {
    %c0_i32 = arith.constant 0 : i32
    %c0_i32_0 = arith.constant 0 : i32
    %c0_i32_1 = arith.constant 0 : i32
    return %arg0, %c0_i32, %c0_i32_0 : i32, i32, i32
  }
}

</mosaic_0001>

<llo_original>
// kernel: tpu_custom_call.1
$region0: #{tpu_custom_call.1}
  #allocation0 [shape = 'u32[]', space=smem, size = 0x4, offset = 0x4, fixed_abs, tag = 'smem constant byte address 0x4 - core index']
  #allocation1 [shape = 'u32[144,128]{1,0:T(1,128)}', space=vmem, size = 0x12000, scoped, tag = 'internal scratch']
  %s0 = inlined_call_operand.hbm [shape: f32[16,128], index: 0, kind: input, shape index: {}]
  %s1 = inlined_call_operand.hbm [shape: f32[16,128], index: 1, kind: input, shape index: {}]
  %s2 = inlined_call_operand.hbm [shape: f32[1,8,128], index: 2, kind: output, shape index: {}]
  %s3 = sld [smem:[#allocation0]]
  $region26: #{tpu_custom_call.1} parent=0
    _
  %s5 = ssub.s32 1, %s3
  %s6 = scalar_select 0, %s5, %s3
  $region1: #{tpu_custom_call.1} parent=0
    #allocation2 [shape = 'u8[8192]{0}', space=vmem, size = 0x2000, scoped, tag = 'input window, operand 0, single buffered']
    #allocation3 [shape = 's32[1]{0}', space=sflag, size = 0x4, scoped, tag = 'scoped memory for tpu_custom_call.1']
    #allocation4 [shape = 's32[1]{0}', space=sflag, size = 0x4, scoped, tag = 'scoped memory for tpu_custom_call.1']
    #allocation5 [shape = 'u8[8192]{0}', space=vmem, size = 0x2000, scoped, tag = 'input window, operand 1, single buffered']
    #allocation6 [shape = 's32[1]{0}', space=sflag, size = 0x4, scoped, tag = 'scoped memory for tpu_custom_call.1']
    #allocation7 [shape = 'u8[4096]{0}', space=vmem, size = 0x1000, scoped, tag = 'output window, operand 0, single buffered']
    %7 = vsyncpa [#allocation3], 0
    %8 = vsyncpa [#allocation6], 0
    %9 = vsyncpa [#allocation4], 0
    // Predicated region
    $region2: #{tpu_custom_call.1} parent=1 // pred_check
      _
    $region3: #{tpu_custom_call.1} parent=1 // pred_check_branch
      %11 = sbr.rel (0) target = $region5
    $region4: #{tpu_custom_call.1} parent=1 // pred_region
      %s13 = ssub.s32 256, 256
      %14 = vsyncadd [#allocation3], %s13
      %s15 = sshll.u32 [#allocation2], 4
      %s16 = int_to_ptr.vmem [resolvable:$true] %s15
      %21 = dma.hbm_to_vmem [thread:$0]  %s0, 256, %s16, [#allocation3], 128, 128, 8
    $region5: #{tpu_custom_call.1} parent=1 // pred_fallthru
      _
    // Predicated region
    $region6: #{tpu_custom_call.1} parent=1 // pred_check
      _
    $region7: #{tpu_custom_call.1} parent=1 // pred_check_branch
      %23 = sbr.rel (0) target = $region9
    $region8: #{tpu_custom_call.1} parent=1 // pred_region
      %s25 = ssub.s32 256, 256
      %26 = vsyncadd [#allocation6], %s25
      %s27 = sshll.u32 [#allocation5], 4
      %s28 = int_to_ptr.vmem [resolvable:$true] %s27
      %33 = dma.hbm_to_vmem [thread:$0]  %s1, 256, %s28, [#allocation6], 128, 128, 8
    $region9: #{tpu_custom_call.1} parent=1 // pred_fallthru
      _
    // Predicated region
    $region10: #{tpu_custom_call.1} parent=1 // pred_check
      _
    $region11: #{tpu_custom_call.1} parent=1 // pred_check_branch
      %35 = sbr.rel (0) target = $region13
    $region12: #{tpu_custom_call.1} parent=1 // pred_region
      %36 = dma.done [#allocation3], 256
    $region13: #{tpu_custom_call.1} parent=1 // pred_fallthru
      _
    // Predicated region
    $region14: #{tpu_custom_call.1} parent=1 // pred_check
      _
    $region15: #{tpu_custom_call.1} parent=1 // pred_check_branch
      %38 = sbr.rel (0) target = $region17
    $region16: #{tpu_custom_call.1} parent=1 // pred_region
      %39 = dma.done [#allocation6], 256
    $region17: #{tpu_custom_call.1} parent=1 // pred_fallthru
      _
    %v40 = vld [vmem:[#allocation2] sm:$0xff]
    %v41 = vld [vmem:[#allocation2 + $0x8] sm:$0xff]
    %v42 = vld [vmem:[#allocation5] sm:$0xff]
    %v43 = vld [vmem:[#allocation5 + $0x8] sm:$0xff]
    %v44 = vsub.f32 %v40, %v42
    %v45 = vsub.f32 %v41, %v43
    %v46 = vand.u32 2147483647, %v44
    %v47 = vand.u32 2147483647, %v45
    %v48 = vadd.f32 %v46, %v47
    %v49 = vadd.f32 %v48, 0.0
    %50 = vst [vmem:[#allocation7] sm:$0xff] %v49
    // Predicated region
    $region18: #{tpu_custom_call.1} parent=1 // pred_check
      _
    $region19: #{tpu_custom_call.1} parent=1 // pred_check_branch
      %52 = sbr.rel (0) target = $region21
    $region20: #{tpu_custom_call.1} parent=1 // pred_region
      %s54 = ssub.s32 128, 128
      %55 = vsyncadd [#allocation4], %s54
      %s57 = sshll.u32 [#allocation7], 4
      %s58 = int_to_ptr.vmem [resolvable:$true] %s57
      %60 = dma.vmem_to_hbm [thread:$0]  %s58, 128, %s2, [#allocation4]
    $region21: #{tpu_custom_call.1} parent=1 // pred_fallthru
      _
    // Predicated region
    $region22: #{tpu_custom_call.1} parent=1 // pred_check
      _
    $region23: #{tpu_custom_call.1} parent=1 // pred_check_branch
      %62 = sbr.rel (0) target = $region25
    $region24: #{tpu_custom_call.1} parent=1 // pred_region
      %63 = dma.done [#allocation4], 128
    $region25: #{tpu_custom_call.1} parent=1 // pred_fallthru
      _
    %64 = vsyncpa [#allocation3], 1
    %65 = vsyncpa [#allocation6], 1
    %66 = vsyncpa [#allocation4], 1

</llo_original>
